<compile_context>
chip_gen: v6e
topology: v6e:2x2x1
jax: 0.10.0
libtpu: 0.0.40
codegen_flags: <defaults>
</compile_context>

<pallas_src>
import functools

import jax
import jax.numpy as jnp
from jax.experimental import pallas as pl
from jax.experimental.pallas import tpu as pltpu

LANE = 128


def _round_up(x, m):
    return (x + m - 1) // m * m


def _tpu_config():
    """Generation-aware knobs: scoped-VMEM budget, #TensorCores, bf16-VPU.

    v2-v6: 128 MiB physical VMEM, 1 TensorCore, no bf16 VALU before v6.
    v7x (and unknown/future): 64 MiB physical VMEM, 2 TensorCores, bf16 VALU.
    """
    kind = ""
    try:
        kind = jax.devices()[0].device_kind.lower()
    except Exception:
        pass
    old_vpu = any(s in kind for s in ("v2", "v3", "v4", "v5"))        # no bf16 VALU
    big_vmem = any(s in kind for s in ("v2", "v3", "v4", "v5", "v6"))  # 128 MiB VMEM
    vmem_limit = (96 if big_vmem else 48) * 1024 * 1024                # v7x cap < 64 MiB
    num_tc = 1 if big_vmem else 2
    return vmem_limit, num_tc, (not old_vpu)


# ----------------------------------------------------------------------------
# Fused Pallas kernel: ALL n_blocks ResidualFlow blocks in one pallas_call
# (forward path, LDJ=False, dropout p=0, u=None).
#   per block:  x <- x + relu(relu(x @ W1 + b1) @ W2 + b2) @ W3 + b3
# Grid = (batch_tiles, n_blocks).  The output block's index_map ignores the
# inner ("arbitrary") block axis, so it is VMEM-resident across all blocks and
# doubles as the f32 accumulator (no scratch, no final copy): x round-trips
# HBM exactly once per batch tile.  When the whole weight stack fits in VMEM
# it is held resident for the entire grid (single prologue DMA) and indexed
# dynamically by the block id; otherwise we fall back to per-block streaming
# with default double-buffering.  Matmuls use bf16 operands / f32 accumulation;
# bias+ReLU run on the bf16 VALU on v6e/v7x and on the f32 VPU on v5e.
# ----------------------------------------------------------------------------
def _fused_resflow_kernel(x_ref, w1_ref, b1_ref, w2_ref, b2_ref, w3_ref, b3_ref,
                          o_ref, *, weights_resident, vpu_bf16):
    l = pl.program_id(1)
    cdt = w1_ref.dtype                       # MXU operand dtype (bf16)

    @pl.when(l == 0)
    def _():                                 # fresh activation tile per batch tile
        o_ref[...] = x_ref[...]

    if weights_resident:                     # whole weight stack lives in VMEM
        w1, b1 = w1_ref[l], b1_ref[l]
        w2, b2 = w2_ref[l], b2_ref[l]
        w3, b3 = w3_ref[l], b3_ref[l]
    else:                                    # per-block streaming fallback
        w1, b1 = w1_ref[...], b1_ref[...]
        w2, b2 = w2_ref[...], b2_ref[...]
        w3, b3 = w3_ref[...], b3_ref[...]

    a = o_ref[...]                           # f32 accumulator (output-block resident)
    h1 = jnp.dot(a.astype(cdt), w1, preferred_element_type=jnp.float32)
    if vpu_bf16:                             # v6e/v7x: bias+ReLU on bf16 VALU
        h1 = jnp.maximum(h1.astype(cdt) + b1.astype(cdt), 0)
    else:                                    # v5e: f32 VPU path
        h1 = jnp.maximum(h1 + b1, 0.0).astype(cdt)
    h2 = jnp.dot(h1, w2, preferred_element_type=jnp.float32)
    if vpu_bf16:
        h2 = jnp.maximum(h2.astype(cdt) + b2.astype(cdt), 0)
    else:
        h2 = jnp.maximum(h2 + b2, 0.0).astype(cdt)
    f = jnp.dot(h2, w3, preferred_element_type=jnp.float32) + b3
    o_ref[...] = a + f                       # residual add in f32, lane-dense store


# ----------------------------------------------------------------------------
# Parameter construction (deterministic, mirrors _initialize_weights with
# xavier_uniform Linear weights and zero biases). input_dim = 0 (default), so
# there is no `cheby` layer and u=None in forward.
# ----------------------------------------------------------------------------
def _xavier_uniform(key, fan_in, fan_out, dtype=jnp.float32):
    a = (6.0 / (fan_in + fan_out)) ** 0.5
    # stored (in_features, out_features); xavier bound depends only on
    # fan_in + fan_out, so the distribution matches torch's init.
    return jax.random.uniform(key, (fan_in, fan_out), dtype, minval=-a, maxval=a)


def init_invertible_nn(key, dim, hidden_dim, n_blocks, compute_dtype=jnp.bfloat16):
    """Weights stacked over blocks, zero-padded to lane-dense 128-multiples and
    stored in the MXU compute dtype (bf16); biases stay f32 (zero-init)."""
    dpad = _round_up(dim, LANE)
    hpad = _round_up(hidden_dim, LANE)
    w1 = jnp.zeros((n_blocks, dpad, hpad), compute_dtype)
    w2 = jnp.zeros((n_blocks, hpad, hpad), compute_dtype)
    w3 = jnp.zeros((n_blocks, hpad, dpad), compute_dtype)
    for l in range(n_blocks):
        key, k1, k2, k3 = jax.random.split(key, 4)
        w1 = w1.at[l, :dim, :hidden_dim].set(
            _xavier_uniform(k1, dim, hidden_dim).astype(compute_dtype))
        w2 = w2.at[l, :hidden_dim, :hidden_dim].set(
            _xavier_uniform(k2, hidden_dim, hidden_dim).astype(compute_dtype))
        w3 = w3.at[l, :hidden_dim, :dim].set(
            _xavier_uniform(k3, hidden_dim, dim).astype(compute_dtype))
    b1 = jnp.zeros((n_blocks, 1, hpad), jnp.float32)
    b2 = jnp.zeros((n_blocks, 1, hpad), jnp.float32)
    b3 = jnp.zeros((n_blocks, 1, dpad), jnp.float32)
    return dict(w1=w1, b1=b1, w2=w2, b2=b2, w3=w3, b3=b3)


# ----------------------------------------------------------------------------
# Forward passes
# ----------------------------------------------------------------------------
@functools.partial(jax.jit, static_argnames=("block_b",))
def invertible_nn_forward(params, x, *, block_b=None):
    """InvertibleNN.forward(x, u=None, reverse=False) with LDJ=False."""
    n, dim = x.shape
    nb, dpad, hpad = params["w1"].shape

    vmem_limit, num_tc, vpu_bf16 = _tpu_config()

    # --- generation-aware tile sizing ---------------------------------------
    weight_bytes = sum(int(params[k].size) * params[k].dtype.itemsize
                       for k in ("w1", "w2", "w3", "b1", "b2", "b3"))
    # Default pipelining allocates 2 buffers per input even with a constant
    # index_map, so budget 2x when keeping the whole weight stack resident.
    weights_resident = 2 * weight_bytes <= vmem_limit // 3

    # Rough per-row VMEM: double-buffered x & out blocks (f32) + f32
    # intermediates h1/h2 + bf16 operand casts.
    per_row = (4 * dpad + 2 * hpad) * 4 + (dpad + 2 * hpad) * 2
    act_budget = vmem_limit - (2 * weight_bytes if weights_resident else (1 << 20))
    bb_max = max(8, min(4096, (int(act_budget * 0.5) // per_row) // 8 * 8))

    n8 = _round_up(max(n, 8), 8)
    bb = bb_max if block_b is None else max(8, min(block_b, bb_max))
    bb = min(bb, n8)
    if num_tc >= 2 and n8 >= 16:
        # 2 TensorCores (v7x): keep >=2 batch tiles so the "parallel" axis
        # can shard across both cores.
        bb = min(bb, _round_up((n8 + 1) // 2, 8))
    n_pad = _round_up(n8, bb)

    # Zero-pad batch to the tile size and features to 128 lanes (lane-dense
    # loads/stores, MXU K=N=128).  Padded feature columns stay exactly zero
    # through the residual chain (zero weight/bias columns); padded batch rows
    # are sliced off before returning.
    x_pad = jnp.zeros((n_pad, dpad), jnp.float32).at[:n, :dim].set(
        x.astype(jnp.float32))

    if weights_resident:
        # Whole-array blocks with a constant index map -> DMA'd once for the
        # entire grid, never re-fetched per batch tile.
        w_specs = [
            pl.BlockSpec((nb, dpad, hpad), lambda i, l: (0, 0, 0)),
            pl.BlockSpec((nb, 1, hpad), lambda i, l: (0, 0, 0)),
            pl.BlockSpec((nb, hpad, hpad), lambda i, l: (0, 0, 0)),
            pl.BlockSpec((nb, 1, hpad), lambda i, l: (0, 0, 0)),
            pl.BlockSpec((nb, hpad, dpad), lambda i, l: (0, 0, 0)),
            pl.BlockSpec((nb, 1, dpad), lambda i, l: (0, 0, 0)),
        ]
    else:
        # Streaming fallback for very large n_blocks*hpad: per-block tiles
        # indexed by the inner axis, double-buffered by default.
        w_specs = [
            pl.BlockSpec((None, dpad, hpad), lambda i, l: (l, 0, 0)),
            pl.BlockSpec((None, 1, hpad), lambda i, l: (l, 0, 0)),
            pl.BlockSpec((None, hpad, hpad), lambda i, l: (l, 0, 0)),
            pl.BlockSpec((None, 1, hpad), lambda i, l: (l, 0, 0)),
            pl.BlockSpec((None, hpad, dpad), lambda i, l: (l, 0, 0)),
            pl.BlockSpec((None, 1, dpad), lambda i, l: (l, 0, 0)),
        ]

    kernel = functools.partial(_fused_resflow_kernel,
                               weights_resident=weights_resident,
                               vpu_bf16=vpu_bf16)

    out = pl.pallas_call(
        kernel,
        out_shape=jax.ShapeDtypeStruct((n_pad, dpad), jnp.float32),
        grid_spec=pltpu.PrefetchScalarGridSpec(
            num_scalar_prefetch=0,
            grid=(n_pad // bb, nb),
            in_specs=[
                # activation tile: block index constant over the block axis ->
                # DMA'd once per batch tile.
                pl.BlockSpec((bb, dpad), lambda i, l: (i, 0)),
            ] + w_specs,
            # same index map as the input -> block-resident accumulator across
            # the inner "arbitrary" block axis, single writeback per tile.
            out_specs=pl.BlockSpec((bb, dpad), lambda i, l: (i, 0)),
        ),
        # x is only read at l==0 and the same block is written at the end, so
        # aliasing the padded input buffer to the output is safe and saves an
        # (n_pad, dpad) f32 HBM allocation.
        input_output_aliases={0: 0},
        compiler_params=pltpu.CompilerParams(
            dimension_semantics=("parallel", "arbitrary"),
            vmem_limit_bytes=vmem_limit,
        ),
    )(x_pad, params["w1"], params["b1"], params["w2"], params["b2"],
      params["w3"], params["b3"])

    y = out[:n, :dim].astype(x.dtype)
    ldj_total = jnp.float32(0.0)   # each block returns logdet = 0 when LDJ=False
    return y, ldj_total


def invertible_nn_forward_ref(params, x, *, vpu_bf16):
    """Pure-JAX reference with identical (padded, bf16-operand / f32-accum,
    generation-matched epilogue) semantics, for correctness checking."""
    n, dim = x.shape
    nb, dpad, hpad = params["w1"].shape
    cdt = params["w1"].dtype
    a = jnp.zeros((n, dpad), jnp.float32).at[:, :dim].set(x.astype(jnp.float32))
    for l in range(nb):
        h1 = jnp.dot(a.astype(cdt), params["w1"][l],
                     preferred_element_type=jnp.float32)
        if vpu_bf16:
            h1 = jnp.maximum(h1.astype(cdt) + params["b1"][l].astype(cdt), 0)
        else:
            h1 = jnp.maximum(h1 + params["b1"][l], 0.0).astype(cdt)
        h2 = jnp.dot(h1, params["w2"][l], preferred_element_type=jnp.float32)
        if vpu_bf16:
            h2 = jnp.maximum(h2.astype(cdt) + params["b2"][l].astype(cdt), 0)
        else:
            h2 = jnp.maximum(h2 + params["b2"][l], 0.0).astype(cdt)
        f = jnp.dot(h2, params["w3"][l],
                    preferred_element_type=jnp.float32) + params["b3"][l]
        a = a + f
    return a[:, :dim].astype(x.dtype), jnp.float32(0.0)


# TODO(synk): reverse=False path only. The `reverse=True` fixed-point inversion
# (data-dependent convergence loop), the LDJ=True per-sample jacobian slogdet,
# and the u/cheby conditioning branch are not implemented as Pallas kernels.

if __name__ == "__main__":
    dim, hidden_dim, n_blocks = 8, 32, 3
    batch = 16

    key = jax.random.PRNGKey(0)
    kp, kx = jax.random.split(key)
    params = init_invertible_nn(kp, dim, hidden_dim, n_blocks)
    x = jax.random.normal(kx, (batch, dim), jnp.float32)

    y, ldj = invertible_nn_forward(params, x)
    y = jax.block_until_ready(y)

    _, _, vpu_bf16 = _tpu_config()
    y_ref, ldj_ref = invertible_nn_forward_ref(params, x, vpu_bf16=vpu_bf16)
    assert y.shape == (batch, dim)
    assert jnp.allclose(y, y_ref, atol=1e-3, rtol=1e-3), "mismatch vs reference"
    assert not jnp.allclose(y, x, atol=1e-3), "kernel did not transform input"
    assert float(ldj) == float(ldj_ref) == 0.0

    print("KERNEL_OK")
</pallas_src>

<mosaic_0001>
module attributes {stable_mosaic.version = 11 : i64} {
  func.func @_fused_resflow_kernel(%arg0: i32, %arg1: i32, %arg2: memref<8x128xf32, #tpu.memory_space<vmem>>, %arg3: memref<3x128x128xbf16, #tpu.memory_space<vmem>>, %arg4: memref<3x1x128xf32, #tpu.memory_space<vmem>>, %arg5: memref<3x128x128xbf16, #tpu.memory_space<vmem>>, %arg6: memref<3x1x128xf32, #tpu.memory_space<vmem>>, %arg7: memref<3x128x128xbf16, #tpu.memory_space<vmem>>, %arg8: memref<3x1x128xf32, #tpu.memory_space<vmem>>, %arg9: memref<8x128xf32, #tpu.memory_space<vmem>>) attributes {dimension_semantics = [#tpu.dimension_semantics<parallel>, #tpu.dimension_semantics<arbitrary>], iteration_bounds = array<i64: 2, 3>, scalar_prefetch = 0 : i64, scratch_operands = 0 : i64, tpu.core_type = #tpu.core_type<tc>, window_params = [{transform_indices = @transform_0, window_bounds = array<i64: 8, 128>}, {pipeline_mode = #tpu.pipeline_mode<synchronous>, transform_indices = @transform_1, window_bounds = array<i64: 3, 128, 128>}, {pipeline_mode = #tpu.pipeline_mode<synchronous>, transform_indices = @transform_2, window_bounds = array<i64: 3, 1, 128>}, {pipeline_mode = #tpu.pipeline_mode<synchronous>, transform_indices = @transform_3, window_bounds = array<i64: 3, 128, 128>}, {pipeline_mode = #tpu.pipeline_mode<synchronous>, transform_indices = @transform_4, window_bounds = array<i64: 3, 1, 128>}, {pipeline_mode = #tpu.pipeline_mode<synchronous>, transform_indices = @transform_5, window_bounds = array<i64: 3, 128, 128>}, {pipeline_mode = #tpu.pipeline_mode<synchronous>, transform_indices = @transform_6, window_bounds = array<i64: 3, 1, 128>}, {transform_indices = @transform_7, window_bounds = array<i64: 8, 128>}]} {
    %c0_i32 = arith.constant 0 : i32
    %0 = arith.cmpi eq, %arg1, %c0_i32 : i32
    %1 = arith.extui %0 : i1 to i32
    %c0_i32_0 = arith.constant 0 : i32
    %2 = arith.cmpi ne, %1, %c0_i32_0 : i32
    scf.if %2 {
      %c0_20 = arith.constant 0 : index
      %c0_21 = arith.constant 0 : index
      %42 = vector.load %arg2[%c0_20, %c0_21] : memref<8x128xf32, #tpu.memory_space<vmem>>, vector<8x128xf32>
      %c0_22 = arith.constant 0 : index
      %c0_23 = arith.constant 0 : index
      %43 = vector.load %arg9[%c0_22, %c0_23] : memref<8x128xf32, #tpu.memory_space<vmem>>, vector<8x128xf32>
      tpu.vector_store %arg9[%c0_22, %c0_23], %42 {strides = array<i32>} : memref<8x128xf32, #tpu.memory_space<vmem>>, vector<8x128xf32>,
    } else {
    }
    %3 = arith.index_cast %arg1 : i32 to index
    %c0 = arith.constant 0 : index
    %c0_1 = arith.constant 0 : index
    %4 = vector.load %arg3[%3, %c0, %c0_1] : memref<3x128x128xbf16, #tpu.memory_space<vmem>>, vector<1x128x128xbf16>
    %5 = vector.shape_cast %4 : vector<1x128x128xbf16> to vector<128x128xbf16>
    %6 = arith.index_cast %arg1 : i32 to index
    %c0_2 = arith.constant 0 : index
    %c0_3 = arith.constant 0 : index
    %7 = vector.load %arg4[%6, %c0_2, %c0_3] : memref<3x1x128xf32, #tpu.memory_space<vmem>>, vector<1x1x128xf32>
    %8 = vector.shape_cast %7 : vector<1x1x128xf32> to vector<1x128xf32>
    %9 = arith.index_cast %arg1 : i32 to index
    %c0_4 = arith.constant 0 : index
    %c0_5 = arith.constant 0 : index
    %10 = vector.load %arg5[%9, %c0_4, %c0_5] : memref<3x128x128xbf16, #tpu.memory_space<vmem>>, vector<1x128x128xbf16>
    %11 = vector.shape_cast %10 : vector<1x128x128xbf16> to vector<128x128xbf16>
    %12 = arith.index_cast %arg1 : i32 to index
    %c0_6 = arith.constant 0 : index
    %c0_7 = arith.constant 0 : index
    %13 = vector.load %arg6[%12, %c0_6, %c0_7] : memref<3x1x128xf32, #tpu.memory_space<vmem>>, vector<1x1x128xf32>
    %14 = vector.shape_cast %13 : vector<1x1x128xf32> to vector<1x128xf32>
    %15 = arith.index_cast %arg1 : i32 to index
    %c0_8 = arith.constant 0 : index
    %c0_9 = arith.constant 0 : index
    %16 = vector.load %arg7[%15, %c0_8, %c0_9] : memref<3x128x128xbf16, #tpu.memory_space<vmem>>, vector<1x128x128xbf16>
    %17 = vector.shape_cast %16 : vector<1x128x128xbf16> to vector<128x128xbf16>
    %18 = arith.index_cast %arg1 : i32 to index
    %c0_10 = arith.constant 0 : index
    %c0_11 = arith.constant 0 : index
    %19 = vector.load %arg8[%18, %c0_10, %c0_11] : memref<3x1x128xf32, #tpu.memory_space<vmem>>, vector<1x1x128xf32>
    %20 = vector.shape_cast %19 : vector<1x1x128xf32> to vector<1x128xf32>
    %c0_12 = arith.constant 0 : index
    %c0_13 = arith.constant 0 : index
    %21 = vector.load %arg9[%c0_12, %c0_13] : memref<8x128xf32, #tpu.memory_space<vmem>>, vector<8x128xf32>
    %22 = arith.truncf %21 : vector<8x128xf32> to vector<8x128xbf16>
    %cst = arith.constant dense<0.000000e+00> : vector<8x128xf32>
    %23 = tpu.matmul %22, %5, %cst {dimension_numbers = #tpu.dot_dimension_numbers<[1], [0], [0], [1], [0, 0, 1, 1], [], []>} : vector<8x128xbf16>, vector<128x128xbf16>, vector<8x128xf32> -> vector<8x128xf32>
    %24 = arith.truncf %23 : vector<8x128xf32> to vector<8x128xbf16>
    %25 = arith.truncf %8 : vector<1x128xf32> to vector<1x128xbf16>
    %26 = vector.broadcast %25 : vector<1x128xbf16> to vector<8x128xbf16>
    %27 = arith.addf %24, %26 : vector<8x128xbf16>
    %cst_14 = arith.constant 0.000000e+00 : bf16
    %28 = vector.broadcast %cst_14 : bf16 to vector<8x128xbf16>
    %29 = arith.maximumf %27, %28 : vector<8x128xbf16>
    %cst_15 = arith.constant dense<0.000000e+00> : vector<8x128xf32>
    %30 = tpu.matmul %29, %11, %cst_15 {dimension_numbers = #tpu.dot_dimension_numbers<[1], [0], [0], [1], [0, 0, 1, 1], [], []>} : vector<8x128xbf16>, vector<128x128xbf16>, vector<8x128xf32> -> vector<8x128xf32>
    %31 = arith.truncf %30 : vector<8x128xf32> to vector<8x128xbf16>
    %32 = arith.truncf %14 : vector<1x128xf32> to vector<1x128xbf16>
    %33 = vector.broadcast %32 : vector<1x128xbf16> to vector<8x128xbf16>
    %34 = arith.addf %31, %33 : vector<8x128xbf16>
    %cst_16 = arith.constant 0.000000e+00 : bf16
    %35 = vector.broadcast %cst_16 : bf16 to vector<8x128xbf16>
    %36 = arith.maximumf %34, %35 : vector<8x128xbf16>
    %cst_17 = arith.constant dense<0.000000e+00> : vector<8x128xf32>
    %37 = tpu.matmul %36, %17, %cst_17 {dimension_numbers = #tpu.dot_dimension_numbers<[1], [0], [0], [1], [0, 0, 1, 1], [], []>} : vector<8x128xbf16>, vector<128x128xbf16>, vector<8x128xf32> -> vector<8x128xf32>
    %38 = vector.broadcast %20 : vector<1x128xf32> to vector<8x128xf32>
    %39 = arith.addf %37, %38 : vector<8x128xf32>
    %40 = arith.addf %21, %39 : vector<8x128xf32>
    %c0_18 = arith.constant 0 : index
    %c0_19 = arith.constant 0 : index
    %41 = vector.load %arg9[%c0_18, %c0_19] : memref<8x128xf32, #tpu.memory_space<vmem>>, vector<8x128xf32>
    tpu.vector_store %arg9[%c0_18, %c0_19], %40 {strides = array<i32>} : memref<8x128xf32, #tpu.memory_space<vmem>>, vector<8x128xf32>,
    return
  }
  func.func @transform_0(%arg0: i32, %arg1: i32) -> (i32, i32) {
    %c0_i32 = arith.constant 0 : i32
    %c0_i32_0 = arith.constant 0 : i32
    return %arg0, %c0_i32 : i32, i32
  }
  func.func @transform_1(%arg0: i32, %arg1: i32) -> (i32, i32, i32) {
    %c0_i32 = arith.constant 0 : i32
    %c0_i32_0 = arith.constant 0 : i32
    %c0_i32_1 = arith.constant 0 : i32
    %c0_i32_2 = arith.constant 0 : i32
    return %c0_i32, %c0_i32_0, %c0_i32_1 : i32, i32, i32
  }
  func.func @transform_2(%arg0: i32, %arg1: i32) -> (i32, i32, i32) {
    %c0_i32 = arith.constant 0 : i32
    %c0_i32_0 = arith.constant 0 : i32
    %c0_i32_1 = arith.constant 0 : i32
    %c0_i32_2 = arith.constant 0 : i32
    return %c0_i32, %c0_i32_0, %c0_i32_1 : i32, i32, i32
  }
  func.func @transform_3(%arg0: i32, %arg1: i32) -> (i32, i32, i32) {
    %c0_i32 = arith.constant 0 : i32
    %c0_i32_0 = arith.constant 0 : i32
    %c0_i32_1 = arith.constant 0 : i32
    %c0_i32_2 = arith.constant 0 : i32
    return %c0_i32, %c0_i32_0, %c0_i32_1 : i32, i32, i32
  }
  func.func @transform_4(%arg0: i32, %arg1: i32) -> (i32, i32, i32) {
    %c0_i32 = arith.constant 0 : i32
    %c0_i32_0 = arith.constant 0 : i32
    %c0_i32_1 = arith.constant 0 : i32
    %c0_i32_2 = arith.constant 0 : i32
    return %c0_i32, %c0_i32_0, %c0_i32_1 : i32, i32, i32
  }
  func.func @transform_5(%arg0: i32, %arg1: i32) -> (i32, i32, i32) {
    %c0_i32 = arith.constant 0 : i32
    %c0_i32_0 = arith.constant 0 : i32
    %c0_i32_1 = arith.constant 0 : i32
    %c0_i32_2 = arith.constant 0 : i32
    return %c0_i32, %c0_i32_0, %c0_i32_1 : i32, i32, i32
  }
  func.func @transform_6(%arg0: i32, %arg1: i32) -> (i32, i32, i32) {
    %c0_i32 = arith.constant 0 : i32
    %c0_i32_0 = arith.constant 0 : i32
    %c0_i32_1 = arith.constant 0 : i32
    %c0_i32_2 = arith.constant 0 : i32
    return %c0_i32, %c0_i32_0, %c0_i32_1 : i32, i32, i32
  }
  func.func @transform_7(%arg0: i32, %arg1: i32) -> (i32, i32) {
    %c0_i32 = arith.constant 0 : i32
    %c0_i32_0 = arith.constant 0 : i32
    return %arg0, %c0_i32 : i32, i32
  }
}

</mosaic_0001>

<llo_original>
// kernel: invertible_nn_forward.1
$region0: #{invertible_nn_forward.1}
  #allocation0 [shape = 'u32[]', space=smem, size = 0x4, offset = 0x4, fixed_abs, tag = 'smem constant byte address 0x4 - core index']
  #allocation1 [shape = 'u32[144,128]{1,0:T(1,128)}', space=vmem, size = 0x12000, scoped, tag = 'internal scratch']
  %s0 = inlined_call_operand.vmem [shape: f32[16,128], index: 0, kind: input, shape index: {}, may-alias: {0,7}]
  %s1 = inlined_call_operand.hbm [shape: bf16[3,128,128], index: 1, kind: input, shape index: {}]
  %s2 = inlined_call_operand.vmem [shape: f32[3,1,128], index: 2, kind: input, shape index: {}]
  %s3 = inlined_call_operand.hbm [shape: bf16[3,128,128], index: 3, kind: input, shape index: {}]
  %s4 = inlined_call_operand.vmem [shape: f32[3,1,128], index: 4, kind: input, shape index: {}]
  %s5 = inlined_call_operand.hbm [shape: bf16[3,128,128], index: 5, kind: input, shape index: {}]
  %s6 = inlined_call_operand.vmem [shape: f32[3,1,128], index: 6, kind: input, shape index: {}]
  %s7 = inlined_call_operand.vmem [shape: f32[16,128], index: 7, kind: output, shape index: {}, may-alias: {0,7}]
  %s8 = sld [smem:[#allocation0]]
  $region77: #{invertible_nn_forward.1} parent=0
    _
  %s10 = ssub.s32 1, %s8
  %s11 = scalar_select 0, %s10, %s8
  $region1: #{invertible_nn_forward.1} parent=0
    #allocation2 [shape = 'u8[98304]{0}', space=vmem, size = 0x18000, scoped, tag = 'input window, operand 1, single buffered']
    #allocation3 [shape = 's32[2]{0}', space=sflag, size = 0x8, scoped, tag = 'scoped memory for invertible_nn_forward.1']
    #allocation4 [shape = 'u8[98304]{0}', space=vmem, size = 0x18000, scoped, tag = 'input window, operand 3, single buffered']
    #allocation5 [shape = 's32[1]{0}', space=sflag, size = 0x4, scoped, tag = 'scoped memory for invertible_nn_forward.1']
    #allocation6 [shape = 'u8[98304]{0}', space=vmem, size = 0x18000, scoped, tag = 'input window, operand 5, single buffered']
    %12 = vsyncpa [#allocation3], 0
    %13 = vsyncpa [#allocation5], 0
    loop: start=0, step=1, limit=8
    $region2: #{invertible_nn_forward.1} parent=1 // loop_pre_header
      _
    $region3: #{invertible_nn_forward.1} parent=1 // loop_header
      %s15 = sphi 0, %s19
      %p16 = scmp.ge.s32.totalorder %s15, 8
      %s22 = sphi 0, %s34
      %s23 = sphi 0, %s30
      %s24 = sphi 0, %s22
      %s25 = sphi 0, %s23
      %s26 = sphi 0, %s24
      %s27 = sphi 0, %s25
      %s37 = sphi 0, %s39
      %s40 = sphi 0, %s37
      %s41 = sphi 0, %s40
      %s57 = sphi 0, %s41
      %s61 = sphi 0, %s61
      %s63 = sphi 0, %s61
      %s64 = sphi 0, %s63
      %s78 = sphi 0, %s64
      %s82 = sphi 0, %s82
      %s84 = sphi 0, %s82
      %s85 = sphi 0, %s84
      %s99 = sphi 0, %s85
      %s103 = sphi 0, %s103
      %s105 = sphi 0, %s103
      %s106 = sphi 0, %s105
      %s120 = sphi 0, %s106
      %s124 = sphi 0, %s124
      %s126 = sphi 0, %s124
      %s127 = sphi 0, %s126
      %s141 = sphi 0, %s127
      %s145 = sphi 0, %s145
      %s147 = sphi 0, %s145
      %s148 = sphi 0, %s147
      %s162 = sphi 0, %s148
      %s166 = sphi 0, %s166
      %s168 = sphi 0, %s166
      %s169 = sphi 0, %s168
      %s183 = sphi 0, %s169
      %s189 = sphi 0, %s191
      %s192 = sphi 0, %s189
      %s193 = sphi 0, %s192
      %s209 = sphi 0, %s193
    $region4: #{invertible_nn_forward.1} parent=1 // loop_header_branch
      %18 = sbr.rel (%p16) target = $region8
    $region5: #{invertible_nn_forward.1} parent=1 // loop_body
      %s20 = ssub.s32 %s15, 1
      %s21 = ssub.s32 %s15, 2
      %s28 = sadd.s32 1, %s23
      %p29 = scmp.ge.s32.totalorder %s28, 3
      %s30 = scalar_select %p29, 0, %s28
      %s31 = sadd.s32 1, %s22
      %s32 = scalar_select %p29, %s31, %s22
      %p33 = scmp.ge.s32.totalorder %s32, 2
      %s34 = scalar_select %p33, 0, %s32
      %s35 = ssub.s32 %s22, %s34
      %p36 = scmp.eq.s32.totalorder %s35, 0
      %s38 = sadd.s32 %s37, 1
      %s39 = scalar_select %p36, %s37, %s38
      %p42 = pneg %p36
      %p43 = scmp.eq.s32.totalorder %s15, 5
      %p44 = por %p42, %p43
      %p45 = scmp.ne.s32.totalorder %s37, %s40
      %p46 = scmp.eq.s32.totalorder %s15, 0
      %p47 = por %p45, %p46
      %p48 = scmp.ne.s32.totalorder %s37, %s40
      %p49 = scmp.eq.s32.totalorder %s20, 5
      %p50 = por %p48, %p49
      %p51 = scmp.ne.s32.totalorder %s40, %s41
      %p52 = scmp.eq.s32.totalorder %s20, 0
      %p53 = por %p51, %p52
      %p54 = scmp.ne.s32.totalorder %s40, %s41
      %p55 = scmp.eq.s32.totalorder %s21, 5
      %p56 = por %p54, %p55
      %p58 = scmp.ne.s32.totalorder %s41, %s57
      %p59 = scmp.eq.s32.totalorder %s21, 0
      %p60 = por %p58, %p59
      %s62 = sadd.s32 %s61, 1
      %p65 = scmp.eq.s32.totalorder %s15, 5
      %p66 = scmp.ne.s32.totalorder %s61, %s63
      %p67 = scmp.eq.s32.totalorder %s15, 0
      %p68 = por %p66, %p67
      %p69 = scmp.ne.s32.totalorder %s61, %s63
      %p70 = scmp.eq.s32.totalorder %s20, 5
      %p71 = por %p69, %p70
      %p72 = scmp.ne.s32.totalorder %s63, %s64
      %p73 = scmp.eq.s32.totalorder %s20, 0
      %p74 = por %p72, %p73
      %p75 = scmp.ne.s32.totalorder %s63, %s64
      %p76 = scmp.eq.s32.totalorder %s21, 5
      %p77 = por %p75, %p76
      %p79 = scmp.ne.s32.totalorder %s64, %s78
      %p80 = scmp.eq.s32.totalorder %s21, 0
      %p81 = por %p79, %p80
      %s83 = sadd.s32 %s82, 1
      %p86 = scmp.eq.s32.totalorder %s15, 5
      %p87 = scmp.ne.s32.totalorder %s82, %s84
      %p88 = scmp.eq.s32.totalorder %s15, 0
      %p89 = por %p87, %p88
      %p90 = scmp.ne.s32.totalorder %s82, %s84
      %p91 = scmp.eq.s32.totalorder %s20, 5
      %p92 = por %p90, %p91
      %p93 = scmp.ne.s32.totalorder %s84, %s85
      %p94 = scmp.eq.s32.totalorder %s20, 0
      %p95 = por %p93, %p94
      %p96 = scmp.ne.s32.totalorder %s84, %s85
      %p97 = scmp.eq.s32.totalorder %s21, 5
      %p98 = por %p96, %p97
      %p100 = scmp.ne.s32.totalorder %s85, %s99
      %p101 = scmp.eq.s32.totalorder %s21, 0
      %p102 = por %p100, %p101
      %s104 = sadd.s32 %s103, 1
      %p107 = scmp.eq.s32.totalorder %s15, 5
      %p108 = scmp.ne.s32.totalorder %s103, %s105
      %p109 = scmp.eq.s32.totalorder %s15, 0
      %p110 = por %p108, %p109
      %p111 = scmp.ne.s32.totalorder %s103, %s105
      %p112 = scmp.eq.s32.totalorder %s20, 5
      %p113 = por %p111, %p112
      %p114 = scmp.ne.s32.totalorder %s105, %s106
      %p115 = scmp.eq.s32.totalorder %s20, 0
      %p116 = por %p114, %p115
      %p117 = scmp.ne.s32.totalorder %s105, %s106
      %p118 = scmp.eq.s32.totalorder %s21, 5
      %p119 = por %p117, %p118
      %p121 = scmp.ne.s32.totalorder %s106, %s120
      %p122 = scmp.eq.s32.totalorder %s21, 0
      %p123 = por %p121, %p122
      %s125 = sadd.s32 %s124, 1
      %p128 = scmp.eq.s32.totalorder %s15, 5
      %p129 = scmp.ne.s32.totalorder %s124, %s126
      %p130 = scmp.eq.s32.totalorder %s15, 0
      %p131 = por %p129, %p130
      %p132 = scmp.ne.s32.totalorder %s124, %s126
      %p133 = scmp.eq.s32.totalorder %s20, 5
      %p134 = por %p132, %p133
      %p135 = scmp.ne.s32.totalorder %s126, %s127
      %p136 = scmp.eq.s32.totalorder %s20, 0
      %p137 = por %p135, %p136
      %p138 = scmp.ne.s32.totalorder %s126, %s127
      %p139 = scmp.eq.s32.totalorder %s21, 5
      %p140 = por %p138, %p139
      %p142 = scmp.ne.s32.totalorder %s127, %s141
      %p143 = scmp.eq.s32.totalorder %s21, 0
      %p144 = por %p142, %p143
      %s146 = sadd.s32 %s145, 1
      %p149 = scmp.eq.s32.totalorder %s15, 5
      %p150 = scmp.ne.s32.totalorder %s145, %s147
      %p151 = scmp.eq.s32.totalorder %s15, 0
      %p152 = por %p150, %p151
      %p153 = scmp.ne.s32.totalorder %s145, %s147
      %p154 = scmp.eq.s32.totalorder %s20, 5
      %p155 = por %p153, %p154
      %p156 = scmp.ne.s32.totalorder %s147, %s148
      %p157 = scmp.eq.s32.totalorder %s20, 0
      %p158 = por %p156, %p157
      %p159 = scmp.ne.s32.totalorder %s147, %s148
      %p160 = scmp.eq.s32.totalorder %s21, 5
      %p161 = por %p159, %p160
      %p163 = scmp.ne.s32.totalorder %s148, %s162
      %p164 = scmp.eq.s32.totalorder %s21, 0
      %p165 = por %p163, %p164
      %s167 = sadd.s32 %s166, 1
      %p170 = scmp.eq.s32.totalorder %s15, 5
      %p171 = scmp.ne.s32.totalorder %s166, %s168
      %p172 = scmp.eq.s32.totalorder %s15, 0
      %p173 = por %p171, %p172
      %p174 = scmp.ne.s32.totalorder %s166, %s168
      %p175 = scmp.eq.s32.totalorder %s20, 5
      %p176 = por %p174, %p175
      %p177 = scmp.ne.s32.totalorder %s168, %s169
      %p178 = scmp.eq.s32.totalorder %s20, 0
      %p179 = por %p177, %p178
      %p180 = scmp.ne.s32.totalorder %s168, %s169
      %p181 = scmp.eq.s32.totalorder %s21, 5
      %p182 = por %p180, %p181
      %p184 = scmp.ne.s32.totalorder %s169, %s183
      %p185 = scmp.eq.s32.totalorder %s21, 0
      %p186 = por %p184, %p185
      %s187 = ssub.s32 %s22, %s34
      %p188 = scmp.eq.s32.totalorder %s187, 0
      %s190 = sadd.s32 %s189, 1
      %s191 = scalar_select %p188, %s189, %s190
      %p194 = pneg %p188
      %p195 = scmp.eq.s32.totalorder %s15, 5
      %p196 = por %p194, %p195
      %p197 = scmp.ne.s32.totalorder %s189, %s192
      %p198 = scmp.eq.s32.totalorder %s15, 0
      %p199 = por %p197, %p198
      %p200 = scmp.ne.s32.totalorder %s189, %s192
      %p201 = scmp.eq.s32.totalorder %s20, 5
      %p202 = por %p200, %p201
      %p203 = scmp.ne.s32.totalorder %s192, %s193
      %p204 = scmp.eq.s32.totalorder %s20, 0
      %p205 = por %p203, %p204
      %p206 = scmp.ne.s32.totalorder %s192, %s193
      %p207 = scmp.eq.s32.totalorder %s21, 5
      %p208 = por %p206, %p207
      %p210 = scmp.ne.s32.totalorder %s193, %s209
      %p211 = scmp.eq.s32.totalorder %s21, 0
      %p212 = por %p210, %p211
      %p213 = scmp.le.s32.totalorder 1, %s15
      %p214 = scmp.lt.s32.totalorder %s15, 7
      %p215 = pnand %p213, %p214
      %p216 = pneg %p215
      // Predicated region
      $region9: #{invertible_nn_forward.1} parent=5 // pred_check
        _
      $region10: #{invertible_nn_forward.1} parent=5 // pred_check_branch
        %218 = sbr.rel (%p215) target = $region12
      $region11: #{invertible_nn_forward.1} parent=5 // pred_region
        %s219 = ssub.s32 %s15, 1
        // Predicated region
        $region13: #{invertible_nn_forward.1} parent=11 // pred_check
          %p220 = pneg %p74
        $region14: #{invertible_nn_forward.1} parent=11 // pred_check_branch
          %222 = sbr.rel (%p220) target = $region16
        $region15: #{invertible_nn_forward.1} parent=11 // pred_region
          %s224 = ssub.s32 3072, 3072
          %225 = vsyncadd [#allocation3], %s224
          %s226 = sshll.u32 [#allocation2], 4
          %s227 = int_to_ptr.vmem [resolvable:$true] %s226
          %232 = dma.hbm_to_vmem [thread:$0]  %s1, 3072, %s227, [#allocation3], 64, 64, 4
        $region16: #{invertible_nn_forward.1} parent=11 // pred_fallthru
          _
        // Predicated region
        $region17: #{invertible_nn_forward.1} parent=11 // pred_check
          %p233 = pneg %p95
        $region18: #{invertible_nn_forward.1} parent=11 // pred_check_branch
          %235 = sbr.rel (%p233) target = $region20
        $region19: #{invertible_nn_forward.1} parent=11 // pred_region
          _
        $region20: #{invertible_nn_forward.1} parent=11 // pred_fallthru
          _
        // Predicated region
        $region21: #{invertible_nn_forward.1} parent=11 // pred_check
          %p236 = pneg %p116
        $region22: #{invertible_nn_forward.1} parent=11 // pred_check_branch
          %238 = sbr.rel (%p236) target = $region24
        $region23: #{invertible_nn_forward.1} parent=11 // pred_region
          %s240 = ssub.s32 3072, 3072
          %241 = vsyncadd [#allocation5], %s240
          %s242 = sshll.u32 [#allocation4], 4
          %s243 = int_to_ptr.vmem [resolvable:$true] %s242
          %248 = dma.hbm_to_vmem [thread:$0]  %s3, 3072, %s243, [#allocation5], 64, 64, 4
        $region24: #{invertible_nn_forward.1} parent=11 // pred_fallthru
          _
        // Predicated region
        $region25: #{invertible_nn_forward.1} parent=11 // pred_check
          %p249 = pneg %p137
        $region26: #{invertible_nn_forward.1} parent=11 // pred_check_branch
          %251 = sbr.rel (%p249) target = $region28
        $region27: #{invertible_nn_forward.1} parent=11 // pred_region
          _
        $region28: #{invertible_nn_forward.1} parent=11 // pred_fallthru
          _
        // Predicated region
        $region29: #{invertible_nn_forward.1} parent=11 // pred_check
          %p252 = pneg %p158
        $region30: #{invertible_nn_forward.1} parent=11 // pred_check_branch
          %254 = sbr.rel (%p252) target = $region32
        $region31: #{invertible_nn_forward.1} parent=11 // pred_region
          %s256 = ssub.s32 3072, 3072
          %257 = vsyncadd [#allocation5], %s256
          %s258 = sshll.u32 [#allocation6], 4
          %s259 = int_to_ptr.vmem [resolvable:$true] %s258
          %264 = dma.hbm_to_vmem [thread:$0]  %s5, 3072, %s259, [#allocation5], 64, 64, 4
        $region32: #{invertible_nn_forward.1} parent=11 // pred_fallthru
          _
        // Predicated region
        $region33: #{invertible_nn_forward.1} parent=11 // pred_check
          %p265 = pneg %p179
        $region34: #{invertible_nn_forward.1} parent=11 // pred_check_branch
          %267 = sbr.rel (%p265) target = $region36
        $region35: #{invertible_nn_forward.1} parent=11 // pred_region
          _
        $region36: #{invertible_nn_forward.1} parent=11 // pred_fallthru
          _
      $region12: #{invertible_nn_forward.1} parent=5 // pred_fallthru
        _
      %p268 = scmp.lt.s32.totalorder %s15, 6
      // Predicated region
      $region37: #{invertible_nn_forward.1} parent=5 // pred_check
        %p269 = pneg %p268
      $region38: #{invertible_nn_forward.1} parent=5 // pred_check_branch
        %271 = sbr.rel (%p269) target = $region40
      $region39: #{invertible_nn_forward.1} parent=5 // pred_region
        // Predicated region
        $region41: #{invertible_nn_forward.1} parent=39 // pred_check
          %p272 = pneg %p47
        $region42: #{invertible_nn_forward.1} parent=39 // pred_check_branch
          %274 = sbr.rel (%p272) target = $region44
        $region43: #{invertible_nn_forward.1} parent=39 // pred_region
          %p275 = scmp.lt.s32.totalorder %s22, 1
          %s276 = scalar_select %p275, %s22, 1
          %s277 = smul.addr %s276, 8
          %s278 = scalar_lea.vmem %s0, %s277
        $region44: #{invertible_nn_forward.1} parent=39 // pred_fallthru
          _
      $region40: #{invertible_nn_forward.1} parent=5 // pred_fallthru
        _
      %p279 = scmp.le.s32.totalorder 1, %s15
      %p280 = scmp.lt.s32.totalorder %s15, 7
      %p281 = pnand %p279, %p280
      %p282 = pneg %p281
      // Predicated region
      $region45: #{invertible_nn_forward.1} parent=5 // pred_check
        _
      $region46: #{invertible_nn_forward.1} parent=5 // pred_check_branch
        %284 = sbr.rel (%p281) target = $region48
      $region47: #{invertible_nn_forward.1} parent=5 // pred_region
        %s285 = ssub.s32 %s15, 1
        // Predicated region
        $region49: #{invertible_nn_forward.1} parent=47 // pred_check
          %p286 = pneg %p74
        $region50: #{invertible_nn_forward.1} parent=47 // pred_check_branch
          %288 = sbr.rel (%p286) target = $region52
        $region51: #{invertible_nn_forward.1} parent=47 // pred_region
          %289 = dma.done [#allocation3], 3072
        $region52: #{invertible_nn_forward.1} parent=47 // pred_fallthru
          _
        // Predicated region
        $region53: #{invertible_nn_forward.1} parent=47 // pred_check
          %p290 = pneg %p116
        $region54: #{invertible_nn_forward.1} parent=47 // pred_check_branch
          %292 = sbr.rel (%p290) target = $region56
        $region55: #{invertible_nn_forward.1} parent=47 // pred_region
          %293 = dma.done [#allocation5], 3072
        $region56: #{invertible_nn_forward.1} parent=47 // pred_fallthru
          _
        // Predicated region
        $region57: #{invertible_nn_forward.1} parent=47 // pred_check
          %p294 = pneg %p158
        $region58: #{invertible_nn_forward.1} parent=47 // pred_check_branch
          %296 = sbr.rel (%p294) target = $region60
        $region59: #{invertible_nn_forward.1} parent=47 // pred_region
          %297 = dma.done [#allocation5], 3072
        $region60: #{invertible_nn_forward.1} parent=47 // pred_fallthru
          _
        %p298 = scmp.lt.s32.totalorder %s24, 1
        %s299 = scalar_select %p298, %s24, 1
        %s300 = smul.addr %s299, 8
        %s301 = scalar_lea.vmem %s0, %s300
        %p302 = pneg %p53
        %p303 = pneg %p50
        %p304 = pneg %p74
        %p305 = pneg %p71
        %p306 = pneg %p95
        %p307 = pneg %p92
        %p308 = pneg %p116
        %p309 = pneg %p113
        %p310 = pneg %p137
        %p311 = pneg %p134
        %p312 = pneg %p158
        %p313 = pneg %p155
        %p314 = pneg %p179
        %p315 = pneg %p176
        %p316 = pneg %p205
        %p317 = pneg %p202
        %p318 = scmp.lt.s32.totalorder %s24, 1
        %s319 = scalar_select %p318, %s24, 1
        %s320 = smul.addr %s319, 8
        %s321 = scalar_lea.vmem %s7, %s320
        %p322 = scmp.lt.s32.totalorder %s24, 1
        %s323 = scalar_select %p322, %s24, 1
        %s324 = smul.addr %s323, 8
        %s325 = scalar_lea.vmem %s0, %s324
        %p326 = scmp.lt.s32.totalorder %s24, 1
        %s327 = scalar_select %p326, %s24, 1
        %s328 = smul.addr %s327, 8
        %s329 = scalar_lea.vmem %s7, %s328
        %p331 = scmp.eq.s32.totalorder %s25, 0
        // Predicated region
        $region61: #{invertible_nn_forward.1} parent=47 // pred_check
          %p332 = pneg %p331
        $region62: #{invertible_nn_forward.1} parent=47 // pred_check_branch
          %334 = sbr.rel (%p332) target = $region64
        $region63: #{invertible_nn_forward.1} parent=47 // pred_region
          %v335 = vld [vmem:[%s325] sm:$0xff]
          %336 = vst [vmem:[%s329] sm:$0xff] %v335
        $region64: #{invertible_nn_forward.1} parent=47 // pred_fallthru
          _
        %s337 = smul.u32 %s25, 16
        %s338 = smul.addr %s337, 4
        %s339 = scalar_lea.vmem [#allocation2], %s338
        %v340 = vld [vmem:[%s339] sm:$0xf]
        %v341 = vld [vmem:[%s339 + $0x4] sm:$0xf]
        %v342 = vld [vmem:[%s339 + $0x8] sm:$0xf]
        %v343 = vld [vmem:[%s339 + $0xc] sm:$0xf]
        %v344 = vld [vmem:[%s339 + $0x10] sm:$0xf]
        %v345 = vld [vmem:[%s339 + $0x14] sm:$0xf]
        %v346 = vld [vmem:[%s339 + $0x18] sm:$0xf]
        %v347 = vld [vmem:[%s339 + $0x1c] sm:$0xf]
        %v348 = vld [vmem:[%s339 + $0x20] sm:$0xf]
        %v349 = vld [vmem:[%s339 + $0x24] sm:$0xf]
        %v350 = vld [vmem:[%s339 + $0x28] sm:$0xf]
        %v351 = vld [vmem:[%s339 + $0x2c] sm:$0xf]
        %v352 = vld [vmem:[%s339 + $0x30] sm:$0xf]
        %v353 = vld [vmem:[%s339 + $0x34] sm:$0xf]
        %v354 = vld [vmem:[%s339 + $0x38] sm:$0xf]
        %v355 = vld [vmem:[%s339 + $0x3c] sm:$0xf]
        %s356 = scalar_lea.vmem %s2, %s25
        %v357 = vld [vmem:[%s356] sm:$0x1]
        %s358 = smul.addr %s337, 4
        %s359 = scalar_lea.vmem [#allocation4], %s358
        %v360 = vld [vmem:[%s359] sm:$0xf]
        %v361 = vld [vmem:[%s359 + $0x4] sm:$0xf]
        %v362 = vld [vmem:[%s359 + $0x8] sm:$0xf]
        %v363 = vld [vmem:[%s359 + $0xc] sm:$0xf]
        %v364 = vld [vmem:[%s359 + $0x10] sm:$0xf]
        %v365 = vld [vmem:[%s359 + $0x14] sm:$0xf]
        %v366 = vld [vmem:[%s359 + $0x18] sm:$0xf]
        %v367 = vld [vmem:[%s359 + $0x1c] sm:$0xf]
        %v368 = vld [vmem:[%s359 + $0x20] sm:$0xf]
        %v369 = vld [vmem:[%s359 + $0x24] sm:$0xf]
        %v370 = vld [vmem:[%s359 + $0x28] sm:$0xf]
        %v371 = vld [vmem:[%s359 + $0x2c] sm:$0xf]
        %v372 = vld [vmem:[%s359 + $0x30] sm:$0xf]
        %v373 = vld [vmem:[%s359 + $0x34] sm:$0xf]
        %v374 = vld [vmem:[%s359 + $0x38] sm:$0xf]
        %v375 = vld [vmem:[%s359 + $0x3c] sm:$0xf]
        %s376 = scalar_lea.vmem %s4, %s25
        %v377 = vld [vmem:[%s376] sm:$0x1]
        %s378 = smul.addr %s337, 4
        %s379 = scalar_lea.vmem [#allocation6], %s378
        %v380 = vld [vmem:[%s379] sm:$0xf]
        %v381 = vld [vmem:[%s379 + $0x4] sm:$0xf]
        %v382 = vld [vmem:[%s379 + $0x8] sm:$0xf]
        %v383 = vld [vmem:[%s379 + $0xc] sm:$0xf]
        %v384 = vld [vmem:[%s379 + $0x10] sm:$0xf]
        %v385 = vld [vmem:[%s379 + $0x14] sm:$0xf]
        %v386 = vld [vmem:[%s379 + $0x18] sm:$0xf]
        %v387 = vld [vmem:[%s379 + $0x1c] sm:$0xf]
        %v388 = vld [vmem:[%s379 + $0x20] sm:$0xf]
        %v389 = vld [vmem:[%s379 + $0x24] sm:$0xf]
        %v390 = vld [vmem:[%s379 + $0x28] sm:$0xf]
        %v391 = vld [vmem:[%s379 + $0x2c] sm:$0xf]
        %v392 = vld [vmem:[%s379 + $0x30] sm:$0xf]
        %v393 = vld [vmem:[%s379 + $0x34] sm:$0xf]
        %v394 = vld [vmem:[%s379 + $0x38] sm:$0xf]
        %v395 = vld [vmem:[%s379 + $0x3c] sm:$0xf]
        %s396 = scalar_lea.vmem %s6, %s25
        %v397 = vld [vmem:[%s396] sm:$0x1]
        %v398 = vld [vmem:[%s329] sm:$0xff]
        %v399 = vpack.c.bf16 %v398, %v398
        %v416 = vunpack.c.l.b16 %v340
        %v417 = vunpack.c.l.b16 %v341
        %v418 = vunpack.c.l.b16 %v342
        %v419 = vunpack.c.l.b16 %v343
        %v420 = vunpack.c.l.b16 %v344
        %v421 = vunpack.c.l.b16 %v345
        %v422 = vunpack.c.l.b16 %v346
        %v423 = vunpack.c.l.b16 %v347
        %v424 = vunpack.c.l.b16 %v348
        %v425 = vunpack.c.l.b16 %v349
        %v426 = vunpack.c.l.b16 %v350
        %v427 = vunpack.c.l.b16 %v351
        %v428 = vunpack.c.l.b16 %v352
        %v429 = vunpack.c.l.b16 %v353
        %v430 = vunpack.c.l.b16 %v354
        %v431 = vunpack.c.l.b16 %v355
        %v432 = vpack.c.b16 %v417, %v416
        %v433 = vpack.c.b16 %v419, %v418
        %v434 = vpack.c.b16 %v421, %v420
        %v435 = vpack.c.b16 %v423, %v422
        %v436 = vpack.c.b16 %v425, %v424
        %v437 = vpack.c.b16 %v427, %v426
        %v438 = vpack.c.b16 %v429, %v428
        %v439 = vpack.c.b16 %v431, %v430
        %448 = vmatprep.subr.bf16.mxu0 0
        %449 = vmatpush1.bf16.msra.mxu0 %v439
        %450 = vmatprep.subr.bf16.mxu0 0
        %451 = vmatpush1.bf16.msra.mxu0 %v438
        %452 = vmatprep.subr.bf16.mxu0 0
        %453 = vmatpush1.bf16.msra.mxu0 %v437
        %454 = vmatprep.subr.bf16.mxu0 0
        %455 = vmatpush1.bf16.msra.mxu0 %v436
        %456 = vmatprep.subr.bf16.mxu0 0
        %457 = vmatpush1.bf16.msra.mxu0 %v435
        %458 = vmatprep.subr.bf16.mxu0 0
        %459 = vmatpush1.bf16.msra.mxu0 %v434
        %460 = vmatprep.subr.bf16.mxu0 0
        %461 = vmatpush1.bf16.msra.mxu0 %v433
        %462 = vmatprep.subr.bf16.mxu0 0
        %463 = vmatpush1.bf16.msra.mxu0 %v432
        %464 = vmatprep.subr.bf16.mxu0 0
        %465 = vmatpush2.bf16.msra.mxu0 0
        %466 = vmatprep.subr.bf16.mxu0 0
        %467 = vmatpush2.bf16.msra.mxu0 0
        %468 = vmatprep.subr.bf16.mxu0 0
        %469 = vmatpush2.bf16.msra.mxu0 0
        %470 = vmatprep.subr.bf16.mxu0 0
        %471 = vmatpush2.bf16.msra.mxu0 0
        %472 = vmatprep.subr.bf16.mxu0 0
        %473 = vmatpush2.bf16.msra.mxu0 0
        %474 = vmatprep.subr.bf16.mxu0 0
        %475 = vmatpush2.bf16.msra.mxu0 0
        %476 = vmatprep.subr.bf16.mxu0 0
        %477 = vmatpush2.bf16.msra.mxu0 0
        %478 = vmatprep.subr.bf16.mxu0 0
        %479 = vmatpush2.bf16.msra.mxu0 0
        %480 = vmatprep.mubr.bf16.mxu0 0
        %481 = vmatmul.mubr.bf16.gmra.mxu0 %v399
        %v482 = vpop.f32.mrf.mxu0
        %v483 = vadd.f32 0.0, %v482
        %v484 = vpop.f32.mrf.mxu0
        %v485 = vpop.f32.mrf.mxu0
        %v486 = vpop.f32.mrf.mxu0
        %487 = vdwg.mxu0
        %v488 = vpack.c.bf16 %v483, %v483
        %v489 = vpack.c.bf16 %v357, %v357
        %v491 = vpack.i.b16 %v489, %v489
        %v493 = vlaneseq
        %v494 = vshrl.u32 %v493, 7
        %v495 = vsub.s32 0, %v494
        %v496 = vrot.slane %v491, %v495
        %v497 = vadd.bf16 %v488, %v496
        %v498 = vmax.bf16 %v497, 0
        %v515 = vunpack.c.l.b16 %v360
        %v516 = vunpack.c.l.b16 %v361
        %v517 = vunpack.c.l.b16 %v362
        %v518 = vunpack.c.l.b16 %v363
        %v519 = vunpack.c.l.b16 %v364
        %v520 = vunpack.c.l.b16 %v365
        %v521 = vunpack.c.l.b16 %v366
        %v522 = vunpack.c.l.b16 %v367
        %v523 = vunpack.c.l.b16 %v368
        %v524 = vunpack.c.l.b16 %v369
        %v525 = vunpack.c.l.b16 %v370
        %v526 = vunpack.c.l.b16 %v371
        %v527 = vunpack.c.l.b16 %v372
        %v528 = vunpack.c.l.b16 %v373
        %v529 = vunpack.c.l.b16 %v374
        %v530 = vunpack.c.l.b16 %v375
        %v531 = vpack.c.b16 %v516, %v515
        %v532 = vpack.c.b16 %v518, %v517
        %v533 = vpack.c.b16 %v520, %v519
        %v534 = vpack.c.b16 %v522, %v521
        %v535 = vpack.c.b16 %v524, %v523
        %v536 = vpack.c.b16 %v526, %v525
        %v537 = vpack.c.b16 %v528, %v527
        %v538 = vpack.c.b16 %v530, %v529
        %547 = vmatprep.subr.bf16.mxu0 0
        %548 = vmatpush1.bf16.msra.mxu0 %v538
        %549 = vmatprep.subr.bf16.mxu0 0
        %550 = vmatpush1.bf16.msra.mxu0 %v537
        %551 = vmatprep.subr.bf16.mxu0 0
        %552 = vmatpush1.bf16.msra.mxu0 %v536
        %553 = vmatprep.subr.bf16.mxu0 0
        %554 = vmatpush1.bf16.msra.mxu0 %v535
        %555 = vmatprep.subr.bf16.mxu0 0
        %556 = vmatpush1.bf16.msra.mxu0 %v534
        %557 = vmatprep.subr.bf16.mxu0 0
        %558 = vmatpush1.bf16.msra.mxu0 %v533
        %559 = vmatprep.subr.bf16.mxu0 0
        %560 = vmatpush1.bf16.msra.mxu0 %v532
        %561 = vmatprep.subr.bf16.mxu0 0
        %562 = vmatpush1.bf16.msra.mxu0 %v531
        %563 = vmatprep.subr.bf16.mxu0 0
        %564 = vmatpush2.bf16.msra.mxu0 0
        %565 = vmatprep.subr.bf16.mxu0 0
        %566 = vmatpush2.bf16.msra.mxu0 0
        %567 = vmatprep.subr.bf16.mxu0 0
        %568 = vmatpush2.bf16.msra.mxu0 0
        %569 = vmatprep.subr.bf16.mxu0 0
        %570 = vmatpush2.bf16.msra.mxu0 0
        %571 = vmatprep.subr.bf16.mxu0 0
        %572 = vmatpush2.bf16.msra.mxu0 0
        %573 = vmatprep.subr.bf16.mxu0 0
        %574 = vmatpush2.bf16.msra.mxu0 0
        %575 = vmatprep.subr.bf16.mxu0 0
        %576 = vmatpush2.bf16.msra.mxu0 0
        %577 = vmatprep.subr.bf16.mxu0 0
        %578 = vmatpush2.bf16.msra.mxu0 0
        %579 = vmatprep.mubr.bf16.mxu0 0
        %580 = vmatmul.mubr.bf16.gmra.mxu0 %v498
        %v581 = vpop.f32.mrf.mxu0
        %v582 = vadd.f32 0.0, %v581
        %v583 = vpop.f32.mrf.mxu0
        %v584 = vpop.f32.mrf.mxu0
        %v585 = vpop.f32.mrf.mxu0
        %586 = vdwg.mxu0
        %v587 = vpack.c.bf16 %v582, %v582
        %v588 = vpack.c.bf16 %v377, %v377
        %v590 = vpack.i.b16 %v588, %v588
        %v592 = vlaneseq
        %v593 = vshrl.u32 %v592, 7
        %v594 = vsub.s32 0, %v593
        %v595 = vrot.slane %v590, %v594
        %v596 = vadd.bf16 %v587, %v595
        %v597 = vmax.bf16 %v596, 0
        %v599 = vlaneseq
        %v600 = vshrl.u32 %v599, 7
        %v601 = vsub.s32 0, %v600
        %v602 = vrot.slane %v397, %v601
        %v620 = vunpack.c.l.b16 %v380
        %v621 = vunpack.c.l.b16 %v381
        %v622 = vunpack.c.l.b16 %v382
        %v623 = vunpack.c.l.b16 %v383
        %v624 = vunpack.c.l.b16 %v384
        %v625 = vunpack.c.l.b16 %v385
        %v626 = vunpack.c.l.b16 %v386
        %v627 = vunpack.c.l.b16 %v387
        %v628 = vunpack.c.l.b16 %v388
        %v629 = vunpack.c.l.b16 %v389
        %v630 = vunpack.c.l.b16 %v390
        %v631 = vunpack.c.l.b16 %v391
        %v632 = vunpack.c.l.b16 %v392
        %v633 = vunpack.c.l.b16 %v393
        %v634 = vunpack.c.l.b16 %v394
        %v635 = vunpack.c.l.b16 %v395
        %v636 = vpack.c.b16 %v621, %v620
        %v637 = vpack.c.b16 %v623, %v622
        %v638 = vpack.c.b16 %v625, %v624
        %v639 = vpack.c.b16 %v627, %v626
        %v640 = vpack.c.b16 %v629, %v628
        %v641 = vpack.c.b16 %v631, %v630
        %v642 = vpack.c.b16 %v633, %v632
        %v643 = vpack.c.b16 %v635, %v634
        %652 = vmatprep.subr.bf16.mxu0 0
        %653 = vmatpush1.bf16.msra.mxu0 %v643
        %654 = vmatprep.subr.bf16.mxu0 0
        %655 = vmatpush1.bf16.msra.mxu0 %v642
        %656 = vmatprep.subr.bf16.mxu0 0
        %657 = vmatpush1.bf16.msra.mxu0 %v641
        %658 = vmatprep.subr.bf16.mxu0 0
        %659 = vmatpush1.bf16.msra.mxu0 %v640
        %660 = vmatprep.subr.bf16.mxu0 0
        %661 = vmatpush1.bf16.msra.mxu0 %v639
        %662 = vmatprep.subr.bf16.mxu0 0
        %663 = vmatpush1.bf16.msra.mxu0 %v638
        %664 = vmatprep.subr.bf16.mxu0 0
        %665 = vmatpush1.bf16.msra.mxu0 %v637
        %666 = vmatprep.subr.bf16.mxu0 0
        %667 = vmatpush1.bf16.msra.mxu0 %v636
        %668 = vmatprep.subr.bf16.mxu0 0
        %669 = vmatpush2.bf16.msra.mxu0 0
        %670 = vmatprep.subr.bf16.mxu0 0
        %671 = vmatpush2.bf16.msra.mxu0 0
        %672 = vmatprep.subr.bf16.mxu0 0
        %673 = vmatpush2.bf16.msra.mxu0 0
        %674 = vmatprep.subr.bf16.mxu0 0
        %675 = vmatpush2.bf16.msra.mxu0 0
        %676 = vmatprep.subr.bf16.mxu0 0
        %677 = vmatpush2.bf16.msra.mxu0 0
        %678 = vmatprep.subr.bf16.mxu0 0
        %679 = vmatpush2.bf16.msra.mxu0 0
        %680 = vmatprep.subr.bf16.mxu0 0
        %681 = vmatpush2.bf16.msra.mxu0 0
        %682 = vmatprep.subr.bf16.mxu0 0
        %683 = vmatpush2.bf16.msra.mxu0 0
        %684 = vmatprep.mubr.bf16.mxu0 0
        %685 = vmatmul.mubr.bf16.gmra.mxu0 %v597
        %v686 = vpop.f32.mrf.mxu0
        %v687 = vadd.f32 %v602, %v686
        %v688 = vpop.f32.mrf.mxu0
        %v689 = vpop.f32.mrf.mxu0
        %v690 = vpop.f32.mrf.mxu0
        %691 = vdwg.mxu0
        %v692 = vadd.f32 %v398, %v687
        %693 = vst [vmem:[%s329] sm:$0xff] %v692
        %p694 = scmp.lt.s32.totalorder %s24, 1
        %s695 = scalar_select %p694, %s24, 1
        %s696 = smul.addr %s695, 8
        %s697 = scalar_lea.vmem %s7, %s696
        // Predicated region
        $region65: #{invertible_nn_forward.1} parent=47 // pred_check
          %p698 = pneg %p202
        $region66: #{invertible_nn_forward.1} parent=47 // pred_check_branch
          %700 = sbr.rel (%p698) target = $region68
        $region67: #{invertible_nn_forward.1} parent=47 // pred_region
          _
        $region68: #{invertible_nn_forward.1} parent=47 // pred_fallthru
          _
      $region48: #{invertible_nn_forward.1} parent=5 // pred_fallthru
        _
      %p701 = scmp.le.s32.totalorder 2, %s15
      // Predicated region
      $region69: #{invertible_nn_forward.1} parent=5 // pred_check
        %p702 = pneg %p701
      $region70: #{invertible_nn_forward.1} parent=5 // pred_check_branch
        %704 = sbr.rel (%p702) target = $region72
      $region71: #{invertible_nn_forward.1} parent=5 // pred_region
        %s705 = ssub.s32 %s15, 2
        // Predicated region
        $region73: #{invertible_nn_forward.1} parent=71 // pred_check
          %p706 = pneg %p208
        $region74: #{invertible_nn_forward.1} parent=71 // pred_check_branch
          %708 = sbr.rel (%p706) target = $region76
        $region75: #{invertible_nn_forward.1} parent=71 // pred_region
          %p709 = scmp.lt.s32.totalorder %s26, 1
          %s710 = scalar_select %p709, %s26, 1
          %s711 = smul.addr %s710, 8
          %s712 = scalar_lea.vmem %s7, %s711
        $region76: #{invertible_nn_forward.1} parent=71 // pred_fallthru
          _
      $region72: #{invertible_nn_forward.1} parent=5 // pred_fallthru
        _
    $region6: #{invertible_nn_forward.1} parent=1 // loop_footer
      %s19 = sadd.s32 1, %s15
    $region7: #{invertible_nn_forward.1} parent=1 // loop_footer_branch
      %14 = sbr.rel target = $region3
    $region8: #{invertible_nn_forward.1} parent=1 // loop_exit
      _
    %713 = vsyncpa [#allocation3], 1
    %s714 = scalar_lea.sflag [#allocation3], 1
    %715 = vsyncpa %s714, 1
    %716 = vsyncpa [#allocation5], 1

</llo_original>
